<compile_context>
chip_gen: v7x
topology: tpu7x:2x2x1
jax: 0.10.0
libtpu: 0.0.40
codegen_flags: <defaults>
</compile_context>

<pallas_src>
import math
import jax
import jax.numpy as jnp
from jax.experimental import pallas as pl
from jax.experimental.pallas import tpu as pltpu


def _round_up(a, b):
    return (a + b - 1) // b * b


def _gcn_kernel_fused_w(adj_ref, h_ref, w_ref, b_ref, o_ref, acc_ref):
    """Accumulate adj_tile @ x_tile; apply W + bias in the epilogue."""
    k = pl.program_id(1)

    @pl.when(k == 0)
    def _init():
        acc_ref[...] = jnp.zeros_like(acc_ref)

    acc_ref[...] += jnp.dot(adj_ref[...], h_ref[...],
                            preferred_element_type=jnp.float32)

    @pl.when(k == pl.num_programs(1) - 1)
    def _epilogue():
        out = jnp.dot(acc_ref[...].astype(w_ref.dtype), w_ref[...],
                      preferred_element_type=jnp.float32)
        o_ref[...] = (out + b_ref[...]).astype(o_ref.dtype)


def _gcn_kernel_pre_w(adj_ref, h_ref, b_ref, o_ref, acc_ref):
    """h already equals x @ W; accumulate adj_tile @ h_tile, bias in epilogue."""
    k = pl.program_id(1)

    @pl.when(k == 0)
    def _init():
        acc_ref[...] = jnp.zeros_like(acc_ref)

    acc_ref[...] += jnp.dot(adj_ref[...], h_ref[...],
                            preferred_element_type=jnp.float32)

    @pl.when(k == pl.num_programs(1) - 1)
    def _epilogue():
        o_ref[...] = (acc_ref[...] + b_ref[...]).astype(o_ref.dtype)


def graph_convolution(x, adj, weight, bias=None, *, mxu_dtype=jnp.bfloat16,
                      tm_max=256, tk_max=512):
    """Pallas TPU implementation of GraphConvolution.forward(x, adj).

    x: [N, C_in], adj: [N, N], weight: [C_in, C_out], bias: [C_out] or None.
    """
    n, c_in = x.shape
    c_out = weight.shape[1]
    out_dtype = x.dtype

    # Matmul association: put the *smaller* channel dim on the adj contraction.
    apply_w_in_kernel = c_in <= c_out
    if apply_w_in_kernel:
        h = x                              # features fed to the adj contraction
        feat = c_in
    else:
        # fewer FLOPs / narrower accumulator: apply W before adj @ (.)
        h = jnp.dot(x.astype(mxu_dtype), weight.astype(mxu_dtype),
                    preferred_element_type=jnp.float32)
        feat = c_out

    # Tile sizes (kept modest so 2x double-buffering fits v7x's 64 MiB VMEM;
    # they shrink to the padded problem size for small graphs).
    tm = min(tm_max, _round_up(n, 16))     # output-row tile (sublane aligned)
    tk = min(tk_max, _round_up(n, 128))    # contraction tile (lane aligned)
    np_r = _round_up(n, tm)
    np_c = _round_up(n, tk)
    feat_pad = _round_up(feat, 128)        # lane-dense accumulator width
    cout_pad = _round_up(c_out, 128)       # lane-dense output width

    # Zero-padding is exact for these matmuls; result is sliced at the end.
    adj_p = jnp.pad(adj.astype(mxu_dtype), ((0, np_r - n), (0, np_c - n)))
    h_p = jnp.pad(h.astype(mxu_dtype), ((0, np_c - n), (0, feat_pad - feat)))
    b = bias if bias is not None else jnp.zeros((c_out,), jnp.float32)
    b_p = jnp.pad(b.astype(jnp.float32).reshape(1, c_out),
                  ((0, 0), (0, cout_pad - c_out)))

    grid = (np_r // tm, np_c // tk)
    adj_spec = pl.BlockSpec((tm, tk), lambda i, k: (i, k))
    h_spec = pl.BlockSpec((tk, feat_pad), lambda i, k: (k, 0))
    b_spec = pl.BlockSpec((1, cout_pad), lambda i, k: (0, 0))
    out_spec = pl.BlockSpec((tm, cout_pad), lambda i, k: (i, 0))

    flops = 2 * np_r * np_c * feat_pad
    bytes_accessed = (int(adj_p.size) + int(h_p.size)) * adj_p.dtype.itemsize \
        + np_r * cout_pad * jnp.dtype(out_dtype).itemsize

    if apply_w_in_kernel:
        w_p = jnp.pad(weight.astype(mxu_dtype),
                      ((0, feat_pad - c_in), (0, cout_pad - c_out)))
        w_spec = pl.BlockSpec((feat_pad, cout_pad), lambda i, k: (0, 0))
        flops += 2 * np_r * feat_pad * cout_pad
        bytes_accessed += int(w_p.size) * w_p.dtype.itemsize
        kernel = _gcn_kernel_fused_w
        in_specs = [adj_spec, h_spec, w_spec, b_spec]
        operands = (adj_p, h_p, w_p, b_p)
    else:
        kernel = _gcn_kernel_pre_w
        in_specs = [adj_spec, h_spec, b_spec]
        operands = (adj_p, h_p, b_p)

    out_p = pl.pallas_call(
        kernel,
        out_shape=jax.ShapeDtypeStruct((np_r, cout_pad), out_dtype),
        grid_spec=pltpu.PrefetchScalarGridSpec(
            num_scalar_prefetch=0,
            grid=grid,
            in_specs=in_specs,
            out_specs=out_spec,
            scratch_shapes=[pltpu.VMEM((tm, feat_pad), jnp.float32)],
        ),
        compiler_params=pltpu.CompilerParams(
            dimension_semantics=("parallel", "arbitrary")),
        cost_estimate=pl.CostEstimate(flops=int(flops), transcendentals=0,
                                      bytes_accessed=int(bytes_accessed)),
    )(*operands)

    return out_p[:n, :c_out]


def init_params(key, in_channels, out_channels, bias=False):
    """Deterministic parameter init mirroring the PyTorch module:
    xavier_normal_ for weight, zeros for optional bias."""
    std = math.sqrt(2.0 / (in_channels + out_channels))
    weight = std * jax.random.normal(key, (in_channels, out_channels),
                                     dtype=jnp.float32)
    b = jnp.zeros((out_channels,), dtype=jnp.float32) if bias else None
    return weight, b


if __name__ == "__main__":
    key = jax.random.PRNGKey(0)
    k_x, k_adj, k_w, k_x2, k_adj2, k_w2 = jax.random.split(key, 6)

    # NOTE: at this demo scale a fused XLA HLO would beat any custom call;
    # the tiled kernel is written for graphs with N in the hundreds+.

    # --- Test 1: c_in <= c_out (W applied inside the kernel), no bias ---
    N, C_IN, C_OUT = 16, 8, 32
    x = jax.random.normal(k_x, (N, C_IN), dtype=jnp.float32)
    a = jax.random.uniform(k_adj, (N, N), dtype=jnp.float32)
    adj = (a + a.T) / 2.0
    weight, bias = init_params(k_w, C_IN, C_OUT, bias=False)

    out = jax.block_until_ready(graph_convolution(x, adj, weight, bias))
    ref = (adj @ x) @ weight
    assert out.shape == (N, C_OUT)
    # bf16 MXU inputs -> tolerance appropriate for bf16 rounding
    assert jnp.allclose(out, ref, atol=5e-2, rtol=5e-2)

    # --- Test 2: c_out < c_in (x @ W applied before adj contraction), bias ---
    N2, C_IN2, C_OUT2 = 24, 32, 8
    x2 = jax.random.normal(k_x2, (N2, C_IN2), dtype=jnp.float32)
    a2 = jax.random.uniform(k_adj2, (N2, N2), dtype=jnp.float32)
    adj2 = (a2 + a2.T) / 2.0
    weight2, bias2 = init_params(k_w2, C_IN2, C_OUT2, bias=True)
    bias2 = bias2 + 0.5  # non-zero so the bias add is actually exercised

    out2 = jax.block_until_ready(graph_convolution(x2, adj2, weight2, bias2))
    ref2 = (adj2 @ x2) @ weight2 + bias2
    assert out2.shape == (N2, C_OUT2)
    assert jnp.allclose(out2, ref2, atol=5e-2, rtol=5e-2)

    print("KERNEL_OK")
</pallas_src>

<mosaic_0001>
module attributes {stable_mosaic.version = 11 : i64} {
  func.func @_gcn_kernel_fused_w(%arg0: i32, %arg1: i32, %arg2: memref<16x128xbf16, #tpu.memory_space<vmem>>, %arg3: memref<128x128xbf16, #tpu.memory_space<vmem>>, %arg4: memref<128x128xbf16, #tpu.memory_space<vmem>>, %arg5: memref<1x128xf32, #tpu.memory_space<vmem>>, %arg6: memref<16x128xf32, #tpu.memory_space<vmem>>, %arg7: memref<16x128xf32, #tpu.memory_space<vmem>>) attributes {dimension_semantics = [#tpu.dimension_semantics<parallel>, #tpu.dimension_semantics<arbitrary>], iteration_bounds = array<i64: 1, 1>, scalar_prefetch = 0 : i64, scratch_operands = 1 : i64, tpu.core_type = #tpu.core_type<tc>, window_params = [{transform_indices = @transform_0, window_bounds = array<i64: 16, 128>}, {transform_indices = @transform_1, window_bounds = array<i64: 128, 128>}, {pipeline_mode = #tpu.pipeline_mode<synchronous>, transform_indices = @transform_2, window_bounds = array<i64: 128, 128>}, {pipeline_mode = #tpu.pipeline_mode<synchronous>, transform_indices = @transform_3, window_bounds = array<i64: 1, 128>}, {transform_indices = @transform_4, window_bounds = array<i64: 16, 128>}]} {
    %c0_i32 = arith.constant 0 : i32
    %0 = arith.cmpi eq, %arg1, %c0_i32 : i32
    %1 = arith.extui %0 : i1 to i32
    %c0_i32_0 = arith.constant 0 : i32
    %2 = arith.cmpi ne, %1, %c0_i32_0 : i32
    scf.if %2 {
      %cst_10 = arith.constant 0.000000e+00 : f32
      %12 = vector.broadcast %cst_10 : f32 to vector<16x128xf32>
      %c0_11 = arith.constant 0 : index
      %c0_12 = arith.constant 0 : index
      %13 = vector.load %arg7[%c0_11, %c0_12] : memref<16x128xf32, #tpu.memory_space<vmem>>, vector<16x128xf32>
      tpu.vector_store %arg7[%c0_11, %c0_12], %12 {strides = array<i32>} : memref<16x128xf32, #tpu.memory_space<vmem>>, vector<16x128xf32>,
    } else {
    }
    %c0 = arith.constant 0 : index
    %c0_1 = arith.constant 0 : index
    %3 = vector.load %arg7[%c0, %c0_1] : memref<16x128xf32, #tpu.memory_space<vmem>>, vector<16x128xf32>
    %c0_2 = arith.constant 0 : index
    %c0_3 = arith.constant 0 : index
    %4 = vector.load %arg2[%c0_2, %c0_3] : memref<16x128xbf16, #tpu.memory_space<vmem>>, vector<16x128xbf16>
    %c0_4 = arith.constant 0 : index
    %c0_5 = arith.constant 0 : index
    %5 = vector.load %arg3[%c0_4, %c0_5] : memref<128x128xbf16, #tpu.memory_space<vmem>>, vector<128x128xbf16>
    %cst = arith.constant dense<0.000000e+00> : vector<16x128xf32>
    %6 = tpu.matmul %4, %5, %cst {dimension_numbers = #tpu.dot_dimension_numbers<[1], [0], [0], [1], [0, 0, 1, 1], [], []>} : vector<16x128xbf16>, vector<128x128xbf16>, vector<16x128xf32> -> vector<16x128xf32>
    %7 = arith.addf %3, %6 : vector<16x128xf32>
    %c0_6 = arith.constant 0 : index
    %c0_7 = arith.constant 0 : index
    %8 = vector.load %arg7[%c0_6, %c0_7] : memref<16x128xf32, #tpu.memory_space<vmem>>, vector<16x128xf32>
    tpu.vector_store %arg7[%c0_6, %c0_7], %7 {strides = array<i32>} : memref<16x128xf32, #tpu.memory_space<vmem>>, vector<16x128xf32>,
    %c0_i32_8 = arith.constant 0 : i32
    %9 = arith.cmpi eq, %arg1, %c0_i32_8 : i32
    %10 = arith.extui %9 : i1 to i32
    %c0_i32_9 = arith.constant 0 : i32
    %11 = arith.cmpi ne, %10, %c0_i32_9 : i32
    scf.if %11 {
      %c0_10 = arith.constant 0 : index
      %c0_11 = arith.constant 0 : index
      %12 = vector.load %arg7[%c0_10, %c0_11] : memref<16x128xf32, #tpu.memory_space<vmem>>, vector<16x128xf32>
      %13 = arith.truncf %12 : vector<16x128xf32> to vector<16x128xbf16>
      %c0_12 = arith.constant 0 : index
      %c0_13 = arith.constant 0 : index
      %14 = vector.load %arg4[%c0_12, %c0_13] : memref<128x128xbf16, #tpu.memory_space<vmem>>, vector<128x128xbf16>
      %cst_14 = arith.constant dense<0.000000e+00> : vector<16x128xf32>
      %15 = tpu.matmul %13, %14, %cst_14 {dimension_numbers = #tpu.dot_dimension_numbers<[1], [0], [0], [1], [0, 0, 1, 1], [], []>} : vector<16x128xbf16>, vector<128x128xbf16>, vector<16x128xf32> -> vector<16x128xf32>
      %c0_15 = arith.constant 0 : index
      %c0_16 = arith.constant 0 : index
      %16 = vector.load %arg5[%c0_15, %c0_16] : memref<1x128xf32, #tpu.memory_space<vmem>>, vector<1x128xf32>
      %17 = vector.broadcast %16 : vector<1x128xf32> to vector<16x128xf32>
      %18 = arith.addf %15, %17 : vector<16x128xf32>
      %c0_17 = arith.constant 0 : index
      %c0_18 = arith.constant 0 : index
      %19 = vector.load %arg6[%c0_17, %c0_18] : memref<16x128xf32, #tpu.memory_space<vmem>>, vector<16x128xf32>
      tpu.vector_store %arg6[%c0_17, %c0_18], %18 {strides = array<i32>} : memref<16x128xf32, #tpu.memory_space<vmem>>, vector<16x128xf32>,
    } else {
    }
    return
  }
  func.func @transform_0(%arg0: i32, %arg1: i32) -> (i32, i32) {
    %c0_i32 = arith.constant 0 : i32
    return %arg0, %arg1 : i32, i32
  }
  func.func @transform_1(%arg0: i32, %arg1: i32) -> (i32, i32) {
    %c0_i32 = arith.constant 0 : i32
    %c0_i32_0 = arith.constant 0 : i32
    return %arg1, %c0_i32 : i32, i32
  }
  func.func @transform_2(%arg0: i32, %arg1: i32) -> (i32, i32) {
    %c0_i32 = arith.constant 0 : i32
    %c0_i32_0 = arith.constant 0 : i32
    %c0_i32_1 = arith.constant 0 : i32
    return %c0_i32, %c0_i32_0 : i32, i32
  }
  func.func @transform_3(%arg0: i32, %arg1: i32) -> (i32, i32) {
    %c0_i32 = arith.constant 0 : i32
    %c0_i32_0 = arith.constant 0 : i32
    %c0_i32_1 = arith.constant 0 : i32
    return %c0_i32, %c0_i32_0 : i32, i32
  }
  func.func @transform_4(%arg0: i32, %arg1: i32) -> (i32, i32) {
    %c0_i32 = arith.constant 0 : i32
    %c0_i32_0 = arith.constant 0 : i32
    return %arg0, %c0_i32 : i32, i32
  }
}

</mosaic_0001>

<llo_original>
// kernel: tpu_custom_call.1
$region0: #{tpu_custom_call.1}
  #allocation0 [shape = 'u32[]', space=smem, size = 0x4, offset = 0x4, fixed_abs, tag = 'smem constant byte address 0x4 - core index']
  #allocation1 [shape = 'u32[144,128]{1,0:T(1,128)}', space=vmem, size = 0x12000, scoped, tag = 'internal scratch']
  #allocation2 [shape = 'f32[16,128]{1,0:T(8,128)}', space=vmem, size = 0x2000, scoped, tag = 'scratch operand']
  %s0 = inlined_call_operand.hbm [shape: bf16[16,128], index: 0, kind: input, shape index: {}]
  %s1 = inlined_call_operand.hbm [shape: bf16[128,128], index: 1, kind: input, shape index: {}]
  %s2 = inlined_call_operand.hbm [shape: bf16[128,128], index: 2, kind: input, shape index: {}]
  %s3 = inlined_call_operand.vmem [shape: f32[1,128], index: 3, kind: input, shape index: {}]
  %s4 = inlined_call_operand.hbm [shape: f32[16,128], index: 4, kind: output, shape index: {}]
  %s5 = sld [smem:[#allocation0]]
  $region46: #{tpu_custom_call.1} parent=0
    _
  %s7 = ssub.s32 1, %s5
  %s8 = scalar_select 0, %s7, %s5
  $region1: #{tpu_custom_call.1} parent=0
    #allocation3 [shape = 'u8[4096]{0}', space=vmem, size = 0x1000, scoped, tag = 'input window, operand 0, single buffered']
    #allocation4 [shape = 's32[1]{0}', space=sflag, size = 0x4, scoped, tag = 'scoped memory for tpu_custom_call.1']
    #allocation5 [shape = 's32[1]{0}', space=sflag, size = 0x4, scoped, tag = 'scoped memory for tpu_custom_call.1']
    #allocation6 [shape = 'u8[32768]{0}', space=vmem, size = 0x8000, scoped, tag = 'input window, operand 1, single buffered']
    #allocation7 [shape = 's32[1]{0}', space=sflag, size = 0x4, scoped, tag = 'scoped memory for tpu_custom_call.1']
    #allocation8 [shape = 'u8[32768]{0}', space=vmem, size = 0x8000, scoped, tag = 'input window, operand 2, single buffered']
    #allocation9 [shape = 'u8[8192]{0}', space=vmem, size = 0x2000, scoped, tag = 'output window, operand 0, single buffered']
    %9 = vsyncpa [#allocation4], 0
    %10 = vsyncpa [#allocation7], 0
    %11 = vsyncpa [#allocation5], 0
    // Predicated region
    $region2: #{tpu_custom_call.1} parent=1 // pred_check
      _
    $region3: #{tpu_custom_call.1} parent=1 // pred_check_branch
      %13 = sbr.rel (0) target = $region5
    $region4: #{tpu_custom_call.1} parent=1 // pred_region
      %s15 = ssub.s32 128, 128
      %16 = vsyncadd [#allocation4], %s15
      %s17 = sshll.u32 [#allocation3], 4
      %s18 = int_to_ptr.vmem [resolvable:$true] %s17
      %23 = dma.hbm_to_vmem [thread:$0]  %s0, 128, %s18, [#allocation4], 64, 64, 4
    $region5: #{tpu_custom_call.1} parent=1 // pred_fallthru
      _
    // Predicated region
    $region6: #{tpu_custom_call.1} parent=1 // pred_check
      _
    $region7: #{tpu_custom_call.1} parent=1 // pred_check_branch
      %25 = sbr.rel (0) target = $region9
    $region8: #{tpu_custom_call.1} parent=1 // pred_region
      %s27 = ssub.s32 1024, 1024
      %28 = vsyncadd [#allocation7], %s27
      %s29 = sshll.u32 [#allocation6], 4
      %s30 = int_to_ptr.vmem [resolvable:$true] %s29
      %35 = dma.hbm_to_vmem [thread:$0]  %s1, 1024, %s30, [#allocation7], 64, 64, 4
    $region9: #{tpu_custom_call.1} parent=1 // pred_fallthru
      _
    // Predicated region
    $region10: #{tpu_custom_call.1} parent=1 // pred_check
      _
    $region11: #{tpu_custom_call.1} parent=1 // pred_check_branch
      %37 = sbr.rel (0) target = $region13
    $region12: #{tpu_custom_call.1} parent=1 // pred_region
      %s39 = ssub.s32 1024, 1024
      %40 = vsyncadd [#allocation7], %s39
      %s41 = sshll.u32 [#allocation8], 4
      %s42 = int_to_ptr.vmem [resolvable:$true] %s41
      %47 = dma.hbm_to_vmem [thread:$0]  %s2, 1024, %s42, [#allocation7], 64, 64, 4
    $region13: #{tpu_custom_call.1} parent=1 // pred_fallthru
      _
    // Predicated region
    $region14: #{tpu_custom_call.1} parent=1 // pred_check
      _
    $region15: #{tpu_custom_call.1} parent=1 // pred_check_branch
      %49 = sbr.rel (0) target = $region17
    $region16: #{tpu_custom_call.1} parent=1 // pred_region
      _
    $region17: #{tpu_custom_call.1} parent=1 // pred_fallthru
      _
    // Predicated region
    $region18: #{tpu_custom_call.1} parent=1 // pred_check
      _
    $region19: #{tpu_custom_call.1} parent=1 // pred_check_branch
      %51 = sbr.rel (0) target = $region21
    $region20: #{tpu_custom_call.1} parent=1 // pred_region
      %52 = dma.done [#allocation4], 128
    $region21: #{tpu_custom_call.1} parent=1 // pred_fallthru
      _
    // Predicated region
    $region22: #{tpu_custom_call.1} parent=1 // pred_check
      _
    $region23: #{tpu_custom_call.1} parent=1 // pred_check_branch
      %54 = sbr.rel (0) target = $region25
    $region24: #{tpu_custom_call.1} parent=1 // pred_region
      %55 = dma.done [#allocation7], 1024
    $region25: #{tpu_custom_call.1} parent=1 // pred_fallthru
      _
    // Predicated region
    $region26: #{tpu_custom_call.1} parent=1 // pred_check
      _
    $region27: #{tpu_custom_call.1} parent=1 // pred_check_branch
      %57 = sbr.rel (0) target = $region29
    $region28: #{tpu_custom_call.1} parent=1 // pred_region
      %58 = dma.done [#allocation7], 1024
    $region29: #{tpu_custom_call.1} parent=1 // pred_fallthru
      _
    %p60 = scmp.eq.s32.totalorder 0, 0
    // Predicated region
    $region30: #{tpu_custom_call.1} parent=1 // pred_check
      %p61 = pneg %p60
    $region31: #{tpu_custom_call.1} parent=1 // pred_check_branch
      %63 = sbr.rel (%p61) target = $region33
    $region32: #{tpu_custom_call.1} parent=1 // pred_region
      %64 = vst [vmem:[#allocation2] sm:$0xff] 0.0
      %65 = vst [vmem:[#allocation2 + $0x8] sm:$0xff] 0.0
    $region33: #{tpu_custom_call.1} parent=1 // pred_fallthru
      _
    %v66 = vld [vmem:[#allocation2] sm:$0xff]
    %v67 = vld [vmem:[#allocation2 + $0x8] sm:$0xff]
    %v68 = vld [vmem:[#allocation3] sm:$0xf]
    %v69 = vld [vmem:[#allocation3 + $0x4] sm:$0xf]
    %v70 = vld [vmem:[#allocation6] sm:$0xf]
    %v71 = vld [vmem:[#allocation6 + $0x4] sm:$0xf]
    %v72 = vld [vmem:[#allocation6 + $0x8] sm:$0xf]
    %v73 = vld [vmem:[#allocation6 + $0xc] sm:$0xf]
    %v74 = vld [vmem:[#allocation6 + $0x10] sm:$0xf]
    %v75 = vld [vmem:[#allocation6 + $0x14] sm:$0xf]
    %v76 = vld [vmem:[#allocation6 + $0x18] sm:$0xf]
    %v77 = vld [vmem:[#allocation6 + $0x1c] sm:$0xf]
    %v78 = vld [vmem:[#allocation6 + $0x20] sm:$0xf]
    %v79 = vld [vmem:[#allocation6 + $0x24] sm:$0xf]
    %v80 = vld [vmem:[#allocation6 + $0x28] sm:$0xf]
    %v81 = vld [vmem:[#allocation6 + $0x2c] sm:$0xf]
    %v82 = vld [vmem:[#allocation6 + $0x30] sm:$0xf]
    %v83 = vld [vmem:[#allocation6 + $0x34] sm:$0xf]
    %v84 = vld [vmem:[#allocation6 + $0x38] sm:$0xf]
    %v85 = vld [vmem:[#allocation6 + $0x3c] sm:$0xf]
    %v88 = vunpack.c.l.b16 %v68
    %v89 = vunpack.c.l.b16 %v69
    %v90 = vpack.c.b16 %v89, %v88
    %v108 = vunpack.c.l.b16 %v70
    %v109 = vunpack.c.l.b16 %v71
    %v110 = vunpack.c.l.b16 %v72
    %v111 = vunpack.c.l.b16 %v73
    %v112 = vunpack.c.l.b16 %v74
    %v113 = vunpack.c.l.b16 %v75
    %v114 = vunpack.c.l.b16 %v76
    %v115 = vunpack.c.l.b16 %v77
    %v116 = vunpack.c.l.b16 %v78
    %v117 = vunpack.c.l.b16 %v79
    %v118 = vunpack.c.l.b16 %v80
    %v119 = vunpack.c.l.b16 %v81
    %v120 = vunpack.c.l.b16 %v82
    %v121 = vunpack.c.l.b16 %v83
    %v122 = vunpack.c.l.b16 %v84
    %v123 = vunpack.c.l.b16 %v85
    %v124 = vpack.c.b16 %v109, %v108
    %v125 = vpack.c.b16 %v111, %v110
    %v126 = vpack.c.b16 %v113, %v112
    %v127 = vpack.c.b16 %v115, %v114
    %v128 = vpack.c.b16 %v117, %v116
    %v129 = vpack.c.b16 %v119, %v118
    %v130 = vpack.c.b16 %v121, %v120
    %v131 = vpack.c.b16 %v123, %v122
    %140 = vmatprep.subr.bf16.mxu0 0
    %141 = vmatpush1.bf16.msra.mxu0 %v124
    %142 = vmatprep.subr.bf16.mxu0 0
    %143 = vmatpush1.bf16.msra.mxu0 %v125
    %144 = vmatprep.subr.bf16.mxu0 0
    %145 = vmatpush1.bf16.msra.mxu0 %v126
    %146 = vmatprep.subr.bf16.mxu0 0
    %147 = vmatpush1.bf16.msra.mxu0 %v127
    %148 = vmatprep.subr.bf16.mxu0 0
    %149 = vmatpush1.bf16.msra.mxu0 %v128
    %150 = vmatprep.subr.bf16.mxu0 0
    %151 = vmatpush1.bf16.msra.mxu0 %v129
    %152 = vmatprep.subr.bf16.mxu0 0
    %153 = vmatpush1.bf16.msra.mxu0 %v130
    %154 = vmatprep.subr.bf16.mxu0 0
    %155 = vmatpush1.bf16.msra.mxu0 %v131
    %156 = vmatprep.subr.bf16.mxu0 0
    %157 = vmatpush1.bf16.msra.mxu0 0
    %158 = vmatprep.subr.bf16.mxu0 0
    %159 = vmatpush1.bf16.msra.mxu0 0
    %160 = vmatprep.subr.bf16.mxu0 0
    %161 = vmatpush1.bf16.msra.mxu0 0
    %162 = vmatprep.subr.bf16.mxu0 0
    %163 = vmatpush1.bf16.msra.mxu0 0
    %164 = vmatprep.subr.bf16.mxu0 0
    %165 = vmatpush1.bf16.msra.mxu0 0
    %166 = vmatprep.subr.bf16.mxu0 0
    %167 = vmatpush1.bf16.msra.mxu0 0
    %168 = vmatprep.subr.bf16.mxu0 0
    %169 = vmatpush1.bf16.msra.mxu0 0
    %170 = vmatprep.subr.bf16.mxu0 0
    %171 = vmatpush1.bf16.msra.mxu0 0
    %172 = vmatprep.mubr.bf16.mxu0 0
    %173 = vmatmul.mubr.bf16.gmra.mrb[0].mxu0 %v90
    %v174 = vpop.f32.mrb[0].mxu0
    %v175 = vadd.f32 0.0, %v174
    %v176 = vpop.f32.mrb[0].mxu0
    %v177 = vpop.f32.mrb[0].mxu0
    %v178 = vadd.f32 0.0, %v177
    %v179 = vpop.f32.mrb[0].mxu0
    %180 = vdwg.mxu0
    %v181 = vadd.f32 %v66, %v175
    %v182 = vadd.f32 %v67, %v178
    %183 = vst [vmem:[#allocation2] sm:$0xff] %v181
    %184 = vst [vmem:[#allocation2 + $0x8] sm:$0xff] %v182
    // Predicated region
    $region34: #{tpu_custom_call.1} parent=1 // pred_check
      %p185 = pneg %p60
    $region35: #{tpu_custom_call.1} parent=1 // pred_check_branch
      %187 = sbr.rel (%p185) target = $region37
    $region36: #{tpu_custom_call.1} parent=1 // pred_region
      %v188 = vld [vmem:[#allocation2] sm:$0xff]
      %v189 = vld [vmem:[#allocation2 + $0x8] sm:$0xff]
      %v190 = vpack.c.bf16 %v189, %v188
      %v191 = vld [vmem:[#allocation8] sm:$0xf]
      %v192 = vld [vmem:[#allocation8 + $0x4] sm:$0xf]
      %v193 = vld [vmem:[#allocation8 + $0x8] sm:$0xf]
      %v194 = vld [vmem:[#allocation8 + $0xc] sm:$0xf]
      %v195 = vld [vmem:[#allocation8 + $0x10] sm:$0xf]
      %v196 = vld [vmem:[#allocation8 + $0x14] sm:$0xf]
      %v197 = vld [vmem:[#allocation8 + $0x18] sm:$0xf]
      %v198 = vld [vmem:[#allocation8 + $0x1c] sm:$0xf]
      %v199 = vld [vmem:[#allocation8 + $0x20] sm:$0xf]
      %v200 = vld [vmem:[#allocation8 + $0x24] sm:$0xf]
      %v201 = vld [vmem:[#allocation8 + $0x28] sm:$0xf]
      %v202 = vld [vmem:[#allocation8 + $0x2c] sm:$0xf]
      %v203 = vld [vmem:[#allocation8 + $0x30] sm:$0xf]
      %v204 = vld [vmem:[#allocation8 + $0x34] sm:$0xf]
      %v205 = vld [vmem:[#allocation8 + $0x38] sm:$0xf]
      %v206 = vld [vmem:[#allocation8 + $0x3c] sm:$0xf]
      %v207 = vld [vmem:[%s3] sm:$0x1]
      %v209 = vlaneseq
      %v210 = vshrl.u32 %v209, 7
      %v211 = vsub.s32 0, %v210
      %v212 = vrot.slane %v207, %v211
      %v230 = vunpack.c.l.b16 %v191
      %v231 = vunpack.c.l.b16 %v192
      %v232 = vunpack.c.l.b16 %v193
      %v233 = vunpack.c.l.b16 %v194
      %v234 = vunpack.c.l.b16 %v195
      %v235 = vunpack.c.l.b16 %v196
      %v236 = vunpack.c.l.b16 %v197
      %v237 = vunpack.c.l.b16 %v198
      %v238 = vunpack.c.l.b16 %v199
      %v239 = vunpack.c.l.b16 %v200
      %v240 = vunpack.c.l.b16 %v201
      %v241 = vunpack.c.l.b16 %v202
      %v242 = vunpack.c.l.b16 %v203
      %v243 = vunpack.c.l.b16 %v204
      %v244 = vunpack.c.l.b16 %v205
      %v245 = vunpack.c.l.b16 %v206
      %v246 = vpack.c.b16 %v231, %v230
      %v247 = vpack.c.b16 %v233, %v232
      %v248 = vpack.c.b16 %v235, %v234
      %v249 = vpack.c.b16 %v237, %v236
      %v250 = vpack.c.b16 %v239, %v238
      %v251 = vpack.c.b16 %v241, %v240
      %v252 = vpack.c.b16 %v243, %v242
      %v253 = vpack.c.b16 %v245, %v244
      %262 = vmatprep.subr.bf16.mxu0 0
      %263 = vmatpush1.bf16.msra.mxu0 %v246
      %264 = vmatprep.subr.bf16.mxu0 0
      %265 = vmatpush1.bf16.msra.mxu0 %v247
      %266 = vmatprep.subr.bf16.mxu0 0
      %267 = vmatpush1.bf16.msra.mxu0 %v248
      %268 = vmatprep.subr.bf16.mxu0 0
      %269 = vmatpush1.bf16.msra.mxu0 %v249
      %270 = vmatprep.subr.bf16.mxu0 0
      %271 = vmatpush1.bf16.msra.mxu0 %v250
      %272 = vmatprep.subr.bf16.mxu0 0
      %273 = vmatpush1.bf16.msra.mxu0 %v251
      %274 = vmatprep.subr.bf16.mxu0 0
      %275 = vmatpush1.bf16.msra.mxu0 %v252
      %276 = vmatprep.subr.bf16.mxu0 0
      %277 = vmatpush1.bf16.msra.mxu0 %v253
      %278 = vmatprep.subr.bf16.mxu0 0
      %279 = vmatpush1.bf16.msra.mxu0 0
      %280 = vmatprep.subr.bf16.mxu0 0
      %281 = vmatpush1.bf16.msra.mxu0 0
      %282 = vmatprep.subr.bf16.mxu0 0
      %283 = vmatpush1.bf16.msra.mxu0 0
      %284 = vmatprep.subr.bf16.mxu0 0
      %285 = vmatpush1.bf16.msra.mxu0 0
      %286 = vmatprep.subr.bf16.mxu0 0
      %287 = vmatpush1.bf16.msra.mxu0 0
      %288 = vmatprep.subr.bf16.mxu0 0
      %289 = vmatpush1.bf16.msra.mxu0 0
      %290 = vmatprep.subr.bf16.mxu0 0
      %291 = vmatpush1.bf16.msra.mxu0 0
      %292 = vmatprep.subr.bf16.mxu0 0
      %293 = vmatpush1.bf16.msra.mxu0 0
      %294 = vmatprep.mubr.bf16.mxu0 0
      %295 = vmatmul.mubr.bf16.gmra.mrb[0].mxu0 %v190
      %v296 = vpop.f32.mrb[0].mxu0
      %v297 = vadd.f32 %v212, %v296
      %v298 = vpop.f32.mrb[0].mxu0
      %v299 = vpop.f32.mrb[0].mxu0
      %v300 = vadd.f32 %v212, %v299
      %v301 = vpop.f32.mrb[0].mxu0
      %302 = vdwg.mxu0
      %303 = vst [vmem:[#allocation9] sm:$0xff] %v297
      %304 = vst [vmem:[#allocation9 + $0x8] sm:$0xff] %v300
    $region37: #{tpu_custom_call.1} parent=1 // pred_fallthru
      _
    // Predicated region
    $region38: #{tpu_custom_call.1} parent=1 // pred_check
      _
    $region39: #{tpu_custom_call.1} parent=1 // pred_check_branch
      %306 = sbr.rel (0) target = $region41
    $region40: #{tpu_custom_call.1} parent=1 // pred_region
      %s308 = ssub.s32 256, 256
      %309 = vsyncadd [#allocation5], %s308
      %s310 = sshll.u32 [#allocation9], 4
      %s311 = int_to_ptr.vmem [resolvable:$true] %s310
      %316 = dma.vmem_to_hbm [thread:$0]  %s311, 256, %s4, [#allocation5], 128, 128, 8
    $region41: #{tpu_custom_call.1} parent=1 // pred_fallthru
      _
    // Predicated region
    $region42: #{tpu_custom_call.1} parent=1 // pred_check
      _
    $region43: #{tpu_custom_call.1} parent=1 // pred_check_branch
      %318 = sbr.rel (0) target = $region45
    $region44: #{tpu_custom_call.1} parent=1 // pred_region
      %319 = dma.done [#allocation5], 256
    $region45: #{tpu_custom_call.1} parent=1 // pred_fallthru
      _
    %320 = vsyncpa [#allocation4], 1
    %321 = vsyncpa [#allocation7], 1
    %322 = vsyncpa [#allocation5], 1

</llo_original>
